<compile_context>
chip_gen: v6e
topology: v6e:2x2x1
jax: 0.10.0
libtpu: 0.0.40
codegen_flags: <defaults>
</compile_context>

<pallas_src>
import functools

import numpy as np
import jax
import jax.numpy as jnp
from jax.experimental import pallas as pl
from jax.experimental.pallas import tpu as pltpu

EPS = 1e-5
LANE = 128          # channel dims are zero-padded to a multiple of the TPU lane width
MAX_ROW_TILE = 256  # rows per grid step (well under v7x's 32 MiB scoped VMEM default)


def _round_up(x, m):
    return (x + m - 1) // m * m


# ----------------------------- Pallas kernels ------------------------------

def bn_stats_kernel(x_ref, g_ref, b_ref, scale_ref, bias_ref, sum_ref, sq_ref, *, inv_m):
    """Cross-tile BN stats: accumulate per-channel sum / sum-of-squares over the row
    grid, finalize fused (scale, bias) = (g*rsqrt(var+eps), b - mean*scale)."""
    i = pl.program_id(0)

    @pl.when(i == 0)
    def _():
        sum_ref[...] = jnp.zeros_like(sum_ref)
        sq_ref[...] = jnp.zeros_like(sq_ref)

    x = x_ref[...].astype(jnp.float32)
    sum_ref[...] += jnp.sum(x, axis=0, keepdims=True)
    sq_ref[...] += jnp.sum(x * x, axis=0, keepdims=True)

    @pl.when(i == pl.num_programs(0) - 1)
    def _():
        mean = sum_ref[...] * inv_m
        var = sq_ref[...] * inv_m - mean * mean
        scale = g_ref[...] * jax.lax.rsqrt(var + EPS)
        scale_ref[...] = scale
        bias_ref[...] = b_ref[...] - mean * scale


def affine_relu_kernel(x_ref, scale_ref, bias_ref, o_ref):
    """y = relu(x * scale + bias) on a (TM, C) tile; scale/bias are pinned (1, C)."""
    y = x_ref[...].astype(jnp.float32) * scale_ref[...] + bias_ref[...]
    o_ref[...] = jnp.maximum(y, 0.0).astype(o_ref.dtype)


def conv1_bn2_stats_kernel(p_ref, w_ref, g_ref, b_ref,
                           out_ref, scale_ref, bias_ref, sum_ref, sq_ref, *, inv_m):
    """conv1 as an im2col matmul (bf16 operands, f32 accumulate) with the BN2 statistics
    reduction fused in (sum/sumsq scratch, scale/bias finalized on the last step)."""
    i = pl.program_id(0)

    @pl.when(i == 0)
    def _():
        sum_ref[...] = jnp.zeros_like(sum_ref)
        sq_ref[...] = jnp.zeros_like(sq_ref)

    y = jnp.dot(p_ref[...], w_ref[...], preferred_element_type=jnp.float32)
    out_ref[...] = y.astype(out_ref.dtype)
    sum_ref[...] += jnp.sum(y, axis=0, keepdims=True)
    sq_ref[...] += jnp.sum(y * y, axis=0, keepdims=True)

    @pl.when(i == pl.num_programs(0) - 1)
    def _():
        mean = sum_ref[...] * inv_m
        var = sq_ref[...] * inv_m - mean * mean
        scale = g_ref[...] * jax.lax.rsqrt(var + EPS)
        scale_ref[...] = scale
        bias_ref[...] = b_ref[...] - mean * scale


def conv2_proj_add_kernel(p_ref, w_ref, sc_ref, wsc_ref, o_ref):
    """conv2 matmul + fused projection-shortcut 1x1 matmul + residual add."""
    y = jnp.dot(p_ref[...], w_ref[...], preferred_element_type=jnp.float32)
    y = y + jnp.dot(sc_ref[...], wsc_ref[...], preferred_element_type=jnp.float32)
    o_ref[...] = y.astype(o_ref.dtype)


def conv2_ident_add_kernel(p_ref, w_ref, sc_ref, o_ref):
    """conv2 matmul + identity-shortcut residual add (plain VPU add, no eye matmul)."""
    y = jnp.dot(p_ref[...], w_ref[...], preferred_element_type=jnp.float32)
    o_ref[...] = (y + sc_ref[...].astype(jnp.float32)).astype(o_ref.dtype)


# ------------------------------ pallas glue ---------------------------------

def _row_spec(tm, ncols):
    """Row-tiled (TM, C) block that advances with the grid index."""
    return pl.BlockSpec((tm, ncols), lambda i: (i, 0))


def _pinned_spec(shape):
    """Whole-array block pinned resident across the grid (weights, scale/bias)."""
    nd = len(shape)
    return pl.BlockSpec(shape, lambda i, _nd=nd: (0,) * _nd)


def _affine_relu(x_flat, scale, bias, tm, out_dtype):
    m_pad, c_pad = x_flat.shape
    return pl.pallas_call(
        affine_relu_kernel,
        grid=(m_pad // tm,),
        in_specs=[_row_spec(tm, c_pad), _pinned_spec((1, c_pad)), _pinned_spec((1, c_pad))],
        out_specs=_row_spec(tm, c_pad),
        out_shape=jax.ShapeDtypeStruct((m_pad, c_pad), out_dtype),
        compiler_params=pltpu.CompilerParams(dimension_semantics=("parallel",)),
    )(x_flat, scale, bias)


def _batchnorm_relu(x_flat, g, b, m_true, tm, out_dtype):
    """Two tiled passes: cross-tile stats -> fused scale/bias, then apply + ReLU."""
    m_pad, c_pad = x_flat.shape
    scale, bias = pl.pallas_call(
        functools.partial(bn_stats_kernel, inv_m=1.0 / m_true),
        grid=(m_pad // tm,),
        in_specs=[_row_spec(tm, c_pad), _pinned_spec((1, c_pad)), _pinned_spec((1, c_pad))],
        out_specs=(_pinned_spec((1, c_pad)), _pinned_spec((1, c_pad))),
        out_shape=(jax.ShapeDtypeStruct((1, c_pad), jnp.float32),
                   jax.ShapeDtypeStruct((1, c_pad), jnp.float32)),
        scratch_shapes=[pltpu.VMEM((1, c_pad), jnp.float32),
                        pltpu.VMEM((1, c_pad), jnp.float32)],
        compiler_params=pltpu.CompilerParams(dimension_semantics=("arbitrary",)),
    )(x_flat, g.reshape(1, c_pad), b.reshape(1, c_pad))
    return _affine_relu(x_flat, scale, bias, tm, out_dtype)


def _im2col(x_nhwc, ksize, stride, pad):
    """Plain-JAX glue: spatial zero-pad + extract KxK patches -> (N*Ho*Wo, K*K*C)."""
    N, H, W, C = x_nhwc.shape
    xp = jnp.pad(x_nhwc, ((0, 0), (pad, pad), (pad, pad), (0, 0)))
    Ho = (H + 2 * pad - ksize) // stride + 1
    Wo = (W + 2 * pad - ksize) // stride + 1
    cols = []
    for kh in range(ksize):
        for kw in range(ksize):
            cols.append(xp[:, kh:kh + stride * Ho:stride, kw:kw + stride * Wo:stride, :])
    patches = jnp.stack(cols, axis=3)            # (N, Ho, Wo, K*K, C)
    return patches.reshape(N * Ho * Wo, ksize * ksize * C)


# ----------------------------- BasicBlock forward ---------------------------

def basic_block_forward(x_nchw, params, stride):
    N, Cin, H, W = x_nchw.shape
    w1, w2 = params["w1"], params["w2"]
    F_out = w1.shape[0]
    use_proj = (stride != 1) or (Cin != F_out)
    if not use_proj:
        assert stride == 1 and Cin == F_out  # identity shortcut shape requirement

    c_pad = _round_up(Cin, LANE)
    f_pad = _round_up(F_out, LANE)
    Ho = (H + 2 - 3) // stride + 1
    Wo = (W + 2 - 3) // stride + 1

    m1 = N * H * W
    m2 = N * Ho * Wo
    tm1 = min(MAX_ROW_TILE, _round_up(m1, 8)); m1_pad = _round_up(m1, tm1)
    tm2 = min(MAX_ROW_TILE, _round_up(m2, 8)); m2_pad = _round_up(m2, tm2)

    # NHWC, channel-padded to the lane width, rows padded to a tile multiple.
    x_nhwc = jnp.transpose(x_nchw, (0, 2, 3, 1)).astype(jnp.float32)
    x_nhwc = jnp.pad(x_nhwc, ((0, 0), (0, 0), (0, 0), (0, c_pad - Cin)))
    x_flat = jnp.pad(x_nhwc.reshape(m1, c_pad), ((0, m1_pad - m1), (0, 0)))

    g1 = jnp.pad(params["g1"].astype(jnp.float32), (0, c_pad - Cin))
    b1 = jnp.pad(params["b1"].astype(jnp.float32), (0, c_pad - Cin))
    g2 = jnp.pad(params["g2"].astype(jnp.float32), (0, f_pad - F_out))
    b2 = jnp.pad(params["b2"].astype(jnp.float32), (0, f_pad - F_out))

    # ---- pre = relu(bn1(x)) : cross-tile stats + tiled apply, bf16 output ----
    pre_flat = _batchnorm_relu(x_flat, g1, b1, m1, tm1, jnp.bfloat16)
    pre = pre_flat[:m1].reshape(N, H, W, c_pad)

    # ---- conv1 (3x3, stride s, pad 1) as lane-dense im2col matmul + fused BN2 stats ----
    w1_mat = jnp.pad(jnp.transpose(w1, (2, 3, 1, 0)),
                     ((0, 0), (0, 0), (0, c_pad - Cin), (0, f_pad - F_out)))
    w1_mat = w1_mat.reshape(9 * c_pad, f_pad).astype(jnp.bfloat16)
    patches1 = jnp.pad(_im2col(pre, 3, stride, 1), ((0, m2_pad - m2), (0, 0)))
    k1 = 9 * c_pad

    out1, scale2, bias2 = pl.pallas_call(
        functools.partial(conv1_bn2_stats_kernel, inv_m=1.0 / m2),
        grid=(m2_pad // tm2,),
        in_specs=[_row_spec(tm2, k1), _pinned_spec((k1, f_pad)),
                  _pinned_spec((1, f_pad)), _pinned_spec((1, f_pad))],
        out_specs=(_row_spec(tm2, f_pad), _pinned_spec((1, f_pad)), _pinned_spec((1, f_pad))),
        out_shape=(jax.ShapeDtypeStruct((m2_pad, f_pad), jnp.bfloat16),
                   jax.ShapeDtypeStruct((1, f_pad), jnp.float32),
                   jax.ShapeDtypeStruct((1, f_pad), jnp.float32)),
        scratch_shapes=[pltpu.VMEM((1, f_pad), jnp.float32),
                        pltpu.VMEM((1, f_pad), jnp.float32)],
        compiler_params=pltpu.CompilerParams(dimension_semantics=("arbitrary",)),
        cost_estimate=pl.CostEstimate(
            flops=2 * m2_pad * k1 * f_pad, transcendentals=0,
            bytes_accessed=patches1.size * 2 + w1_mat.size * 2 + m2_pad * f_pad * 2),
    )(patches1, w1_mat, g2.reshape(1, f_pad), b2.reshape(1, f_pad))

    # ---- pre2 = relu(bn2(out1)) : tiled apply of the fused scale/bias ----
    pre2_flat = _affine_relu(out1, scale2, bias2, tm2, jnp.bfloat16)
    pre2 = pre2_flat[:m2].reshape(N, Ho, Wo, f_pad)

    # ---- conv2 (3x3, stride 1, pad 1) + shortcut + residual add, fused ----
    w2_mat = jnp.pad(jnp.transpose(w2, (2, 3, 1, 0)),
                     ((0, 0), (0, 0), (0, f_pad - F_out), (0, f_pad - F_out)))
    w2_mat = w2_mat.reshape(9 * f_pad, f_pad).astype(jnp.bfloat16)
    patches2 = jnp.pad(_im2col(pre2, 3, 1, 1), ((0, m2_pad - m2), (0, 0)))
    k2 = 9 * f_pad
    cost2 = pl.CostEstimate(
        flops=2 * m2_pad * k2 * f_pad, transcendentals=0,
        bytes_accessed=patches2.size * 2 + w2_mat.size * 2 + m2_pad * f_pad * 4)

    if use_proj:
        # Projection shortcut = 1x1 strided conv of pre; its matmul is fused into the
        # conv2 kernel so the shortcut never round-trips HBM as a separate tensor.
        sc_src = jnp.pad(pre[:, ::stride, ::stride, :].reshape(m2, c_pad),
                         ((0, m2_pad - m2), (0, 0)))
        wsc_mat = jnp.pad(jnp.transpose(params["wsc"].reshape(F_out, Cin), (1, 0)),
                          ((0, c_pad - Cin), (0, f_pad - F_out))).astype(jnp.bfloat16)
        out_flat = pl.pallas_call(
            conv2_proj_add_kernel,
            grid=(m2_pad // tm2,),
            in_specs=[_row_spec(tm2, k2), _pinned_spec((k2, f_pad)),
                      _row_spec(tm2, c_pad), _pinned_spec((c_pad, f_pad))],
            out_specs=_row_spec(tm2, f_pad),
            out_shape=jax.ShapeDtypeStruct((m2_pad, f_pad), jnp.float32),
            compiler_params=pltpu.CompilerParams(dimension_semantics=("parallel",)),
            cost_estimate=cost2,
        )(patches2, w2_mat, sc_src, wsc_mat)
    else:
        # Identity shortcut: residual add of the original x in the conv2 epilogue.
        assert c_pad == f_pad and m1_pad == m2_pad
        out_flat = pl.pallas_call(
            conv2_ident_add_kernel,
            grid=(m2_pad // tm2,),
            in_specs=[_row_spec(tm2, k2), _pinned_spec((k2, f_pad)), _row_spec(tm2, c_pad)],
            out_specs=_row_spec(tm2, f_pad),
            out_shape=jax.ShapeDtypeStruct((m2_pad, f_pad), jnp.float32),
            compiler_params=pltpu.CompilerParams(dimension_semantics=("parallel",)),
            cost_estimate=cost2,
        )(patches2, w2_mat, x_flat)

    out = out_flat[:m2, :F_out].reshape(N, Ho, Wo, F_out)
    return jnp.transpose(out, (0, 3, 1, 2))   # back to NCHW


# ----------------------------- plain-JAX reference ---------------------------

def reference_forward(x_nchw, params, stride):
    def bn(x, g, b):
        mu = jnp.mean(x, axis=(0, 2, 3), keepdims=True)
        var = jnp.mean((x - mu) ** 2, axis=(0, 2, 3), keepdims=True)
        return ((x - mu) * jax.lax.rsqrt(var + EPS) * g.reshape(1, -1, 1, 1)
                + b.reshape(1, -1, 1, 1))

    def conv(x, w, s, p):
        return jax.lax.conv_general_dilated(
            x, w, (s, s), ((p, p), (p, p)),
            dimension_numbers=("NCHW", "OIHW", "NCHW"),
            precision=jax.lax.Precision.HIGHEST)

    Cin = x_nchw.shape[1]
    F_out = params["w1"].shape[0]
    out = jax.nn.relu(bn(x_nchw, params["g1"], params["b1"]))
    sc = conv(out, params["wsc"], stride, 0) if (stride != 1 or Cin != F_out) else x_nchw
    out = conv(out, params["w1"], stride, 1)
    out = conv(jax.nn.relu(bn(out, params["g2"], params["b2"])), params["w2"], 1, 1)
    return out + sc


# --------------------------------- main --------------------------------------

if __name__ == "__main__":
    def make_params(key, cin, fout, proj):
        ks = jax.random.split(key, 7)
        p = {
            "g1": 1.0 + 0.1 * jax.random.normal(ks[0], (cin,), jnp.float32),
            "b1": 0.05 * jax.random.normal(ks[1], (cin,), jnp.float32),
            "w1": 0.1 * jax.random.normal(ks[2], (fout, cin, 3, 3), jnp.float32),
            "g2": 1.0 + 0.1 * jax.random.normal(ks[3], (fout,), jnp.float32),
            "b2": 0.05 * jax.random.normal(ks[4], (fout,), jnp.float32),
            "w2": 0.1 * jax.random.normal(ks[5], (fout, fout, 3, 3), jnp.float32),
        }
        if proj:
            p["wsc"] = 0.1 * jax.random.normal(ks[6], (fout, cin, 1, 1), jnp.float32)
        return p

    key = jax.random.PRNGKey(0)
    kp1, kx1, kp2, kx2 = jax.random.split(key, 4)

    # Case 1: projection shortcut (stride 2, 4 -> 8 channels).
    N, Cin, H, W, F_out, stride = 2, 4, 16, 16, 8, 2
    params = make_params(kp1, Cin, F_out, proj=True)
    x = jax.random.normal(kx1, (N, Cin, H, W), jnp.float32)
    out = jax.block_until_ready(basic_block_forward(x, params, stride))
    ref = reference_forward(x, params, stride)
    assert out.shape == ref.shape == (N, F_out, H // stride, W // stride)
    np.testing.assert_allclose(np.asarray(out), np.asarray(ref), rtol=2e-2, atol=2e-2)

    # Case 2: identity shortcut (stride 1, in_filters == filters) -> multi-step grids.
    N, Cin, H, W, F_out, stride = 2, 8, 16, 16, 8, 1
    params = make_params(kp2, Cin, F_out, proj=False)
    x = jax.random.normal(kx2, (N, Cin, H, W), jnp.float32)
    out = jax.block_until_ready(basic_block_forward(x, params, stride))
    ref = reference_forward(x, params, stride)
    assert out.shape == ref.shape == (N, F_out, H, W)
    np.testing.assert_allclose(np.asarray(out), np.asarray(ref), rtol=2e-2, atol=2e-2)

    print("KERNEL_OK")
</pallas_src>

<mosaic_0001>
module attributes {stable_mosaic.version = 11 : i64} {
  func.func @bn_stats_kernel(%arg0: i32, %arg1: memref<256x128xf32, #tpu.memory_space<vmem>>, %arg2: memref<1x128xf32, #tpu.memory_space<vmem>>, %arg3: memref<1x128xf32, #tpu.memory_space<vmem>>, %arg4: memref<1x128xf32, #tpu.memory_space<vmem>>, %arg5: memref<1x128xf32, #tpu.memory_space<vmem>>, %arg6: memref<1x128xf32, #tpu.memory_space<vmem>>, %arg7: memref<1x128xf32, #tpu.memory_space<vmem>>) attributes {dimension_semantics = [#tpu.dimension_semantics<arbitrary>], iteration_bounds = array<i64: 2>, scalar_prefetch = 0 : i64, scratch_operands = 2 : i64, tpu.core_type = #tpu.core_type<tc>, window_params = [{transform_indices = @transform_0, window_bounds = array<i64: 256, 128>}, {pipeline_mode = #tpu.pipeline_mode<synchronous>, transform_indices = @transform_1, window_bounds = array<i64: 1, 128>}, {pipeline_mode = #tpu.pipeline_mode<synchronous>, transform_indices = @transform_2, window_bounds = array<i64: 1, 128>}, {pipeline_mode = #tpu.pipeline_mode<synchronous>, transform_indices = @transform_3, window_bounds = array<i64: 1, 128>}, {pipeline_mode = #tpu.pipeline_mode<synchronous>, transform_indices = @transform_4, window_bounds = array<i64: 1, 128>}]} {
    %c0_i32 = arith.constant 0 : i32
    %0 = arith.cmpi eq, %arg0, %c0_i32 : i32
    %1 = arith.extui %0 : i1 to i32
    %c0_i32_0 = arith.constant 0 : i32
    %2 = arith.cmpi ne, %1, %c0_i32_0 : i32
    scf.if %2 {
      %cst_12 = arith.constant 0.000000e+00 : f32
      %18 = vector.broadcast %cst_12 : f32 to vector<1x128xf32>
      %c0_13 = arith.constant 0 : index
      %c0_14 = arith.constant 0 : index
      %19 = vector.load %arg6[%c0_13, %c0_14] : memref<1x128xf32, #tpu.memory_space<vmem>>, vector<1x128xf32>
      tpu.vector_store %arg6[%c0_13, %c0_14], %18 {strides = array<i32>} : memref<1x128xf32, #tpu.memory_space<vmem>>, vector<1x128xf32>,
      %cst_15 = arith.constant 0.000000e+00 : f32
      %20 = vector.broadcast %cst_15 : f32 to vector<1x128xf32>
      %c0_16 = arith.constant 0 : index
      %c0_17 = arith.constant 0 : index
      %21 = vector.load %arg7[%c0_16, %c0_17] : memref<1x128xf32, #tpu.memory_space<vmem>>, vector<1x128xf32>
      tpu.vector_store %arg7[%c0_16, %c0_17], %20 {strides = array<i32>} : memref<1x128xf32, #tpu.memory_space<vmem>>, vector<1x128xf32>,
    } else {
    }
    %c0 = arith.constant 0 : index
    %c0_1 = arith.constant 0 : index
    %3 = vector.load %arg1[%c0, %c0_1] : memref<256x128xf32, #tpu.memory_space<vmem>>, vector<256x128xf32>
    %c0_2 = arith.constant 0 : index
    %c0_3 = arith.constant 0 : index
    %4 = vector.load %arg6[%c0_2, %c0_3] : memref<1x128xf32, #tpu.memory_space<vmem>>, vector<1x128xf32>
    %cst = arith.constant dense<0.000000e+00> : vector<128xf32>
    %5 = vector.multi_reduction <add>, %3, %cst [0] : vector<256x128xf32> to vector<128xf32>
    %6 = vector.shape_cast %5 : vector<128xf32> to vector<1x128xf32>
    %7 = arith.addf %4, %6 : vector<1x128xf32>
    %c0_4 = arith.constant 0 : index
    %c0_5 = arith.constant 0 : index
    %8 = vector.load %arg6[%c0_4, %c0_5] : memref<1x128xf32, #tpu.memory_space<vmem>>, vector<1x128xf32>
    tpu.vector_store %arg6[%c0_4, %c0_5], %7 {strides = array<i32>} : memref<1x128xf32, #tpu.memory_space<vmem>>, vector<1x128xf32>,
    %c0_6 = arith.constant 0 : index
    %c0_7 = arith.constant 0 : index
    %9 = vector.load %arg7[%c0_6, %c0_7] : memref<1x128xf32, #tpu.memory_space<vmem>>, vector<1x128xf32>
    %10 = arith.mulf %3, %3 : vector<256x128xf32>
    %cst_8 = arith.constant dense<0.000000e+00> : vector<128xf32>
    %11 = vector.multi_reduction <add>, %10, %cst_8 [0] : vector<256x128xf32> to vector<128xf32>
    %12 = vector.shape_cast %11 : vector<128xf32> to vector<1x128xf32>
    %13 = arith.addf %9, %12 : vector<1x128xf32>
    %c0_9 = arith.constant 0 : index
    %c0_10 = arith.constant 0 : index
    %14 = vector.load %arg7[%c0_9, %c0_10] : memref<1x128xf32, #tpu.memory_space<vmem>>, vector<1x128xf32>
    tpu.vector_store %arg7[%c0_9, %c0_10], %13 {strides = array<i32>} : memref<1x128xf32, #tpu.memory_space<vmem>>, vector<1x128xf32>,
    %c1_i32 = arith.constant 1 : i32
    %15 = arith.cmpi eq, %arg0, %c1_i32 : i32
    %16 = arith.extui %15 : i1 to i32
    %c0_i32_11 = arith.constant 0 : i32
    %17 = arith.cmpi ne, %16, %c0_i32_11 : i32
    scf.if %17 {
      %c0_12 = arith.constant 0 : index
      %c0_13 = arith.constant 0 : index
      %18 = vector.load %arg6[%c0_12, %c0_13] : memref<1x128xf32, #tpu.memory_space<vmem>>, vector<1x128xf32>
      %cst_14 = arith.constant 0.001953125 : f32
      %19 = vector.broadcast %cst_14 : f32 to vector<1x128xf32>
      %20 = arith.mulf %18, %19 : vector<1x128xf32>
      %c0_15 = arith.constant 0 : index
      %c0_16 = arith.constant 0 : index
      %21 = vector.load %arg7[%c0_15, %c0_16] : memref<1x128xf32, #tpu.memory_space<vmem>>, vector<1x128xf32>
      %cst_17 = arith.constant 0.001953125 : f32
      %22 = vector.broadcast %cst_17 : f32 to vector<1x128xf32>
      %23 = arith.mulf %21, %22 : vector<1x128xf32>
      %24 = arith.mulf %20, %20 : vector<1x128xf32>
      %25 = arith.subf %23, %24 : vector<1x128xf32>
      %c0_18 = arith.constant 0 : index
      %c0_19 = arith.constant 0 : index
      %26 = vector.load %arg2[%c0_18, %c0_19] : memref<1x128xf32, #tpu.memory_space<vmem>>, vector<1x128xf32>
      %cst_20 = arith.constant 9.99999974E-6 : f32
      %27 = vector.broadcast %cst_20 : f32 to vector<1x128xf32>
      %28 = arith.addf %25, %27 : vector<1x128xf32>
      %29 = math.rsqrt %28 : vector<1x128xf32>
      %30 = arith.mulf %26, %29 : vector<1x128xf32>
      %c0_21 = arith.constant 0 : index
      %c0_22 = arith.constant 0 : index
      %31 = vector.load %arg4[%c0_21, %c0_22] : memref<1x128xf32, #tpu.memory_space<vmem>>, vector<1x128xf32>
      tpu.vector_store %arg4[%c0_21, %c0_22], %30 {strides = array<i32>} : memref<1x128xf32, #tpu.memory_space<vmem>>, vector<1x128xf32>,
      %c0_23 = arith.constant 0 : index
      %c0_24 = arith.constant 0 : index
      %32 = vector.load %arg3[%c0_23, %c0_24] : memref<1x128xf32, #tpu.memory_space<vmem>>, vector<1x128xf32>
      %33 = arith.mulf %20, %30 : vector<1x128xf32>
      %34 = arith.subf %32, %33 : vector<1x128xf32>
      %c0_25 = arith.constant 0 : index
      %c0_26 = arith.constant 0 : index
      %35 = vector.load %arg5[%c0_25, %c0_26] : memref<1x128xf32, #tpu.memory_space<vmem>>, vector<1x128xf32>
      tpu.vector_store %arg5[%c0_25, %c0_26], %34 {strides = array<i32>} : memref<1x128xf32, #tpu.memory_space<vmem>>, vector<1x128xf32>,
    } else {
    }
    return
  }
  func.func @transform_0(%arg0: i32) -> (i32, i32) {
    %c0_i32 = arith.constant 0 : i32
    %c0_i32_0 = arith.constant 0 : i32
    return %arg0, %c0_i32 : i32, i32
  }
  func.func @transform_1(%arg0: i32) -> (i32, i32) {
    %c0_i32 = arith.constant 0 : i32
    %c0_i32_0 = arith.constant 0 : i32
    %c0_i32_1 = arith.constant 0 : i32
    return %c0_i32, %c0_i32_0 : i32, i32
  }
  func.func @transform_2(%arg0: i32) -> (i32, i32) {
    %c0_i32 = arith.constant 0 : i32
    %c0_i32_0 = arith.constant 0 : i32
    %c0_i32_1 = arith.constant 0 : i32
    return %c0_i32, %c0_i32_0 : i32, i32
  }
  func.func @transform_3(%arg0: i32) -> (i32, i32) {
    %c0_i32 = arith.constant 0 : i32
    %c0_i32_0 = arith.constant 0 : i32
    %c0_i32_1 = arith.constant 0 : i32
    return %c0_i32, %c0_i32_0 : i32, i32
  }
  func.func @transform_4(%arg0: i32) -> (i32, i32) {
    %c0_i32 = arith.constant 0 : i32
    %c0_i32_0 = arith.constant 0 : i32
    %c0_i32_1 = arith.constant 0 : i32
    return %c0_i32, %c0_i32_0 : i32, i32
  }
}

</mosaic_0001>

<llo_original>
// kernel: tpu_custom_call.1
$region0: #{tpu_custom_call.1}
  #allocation0 [shape = 'u32[]', space=smem, size = 0x4, offset = 0x4, fixed_abs, tag = 'smem constant byte address 0x4 - core index']
  #allocation1 [shape = 'u32[144,128]{1,0:T(1,128)}', space=vmem, size = 0x12000, scoped, tag = 'internal scratch']
  #allocation2 [shape = 'f32[1,128]{1,0:T(1,128)}', space=vmem, size = 0x200, scoped, tag = 'scratch operand']
  #allocation3 [shape = 'f32[1,128]{1,0:T(1,128)}', space=vmem, size = 0x200, scoped, tag = 'scratch operand']
  %s0 = inlined_call_operand.hbm [shape: f32[512,128], index: 0, kind: input, shape index: {}]
  %s1 = inlined_call_operand.vmem [shape: f32[1,128], index: 1, kind: input, shape index: {}]
  %s2 = inlined_call_operand.vmem [shape: f32[1,128], index: 2, kind: input, shape index: {}]
  %s3 = inlined_call_operand.hbm [shape: f32[1,128], index: 3, kind: output, shape index: {0}]
  %s4 = inlined_call_operand.hbm [shape: f32[1,128], index: 4, kind: output, shape index: {1}]
  %5 = xla_tuple %s3, %s4
  %s6 = sld [smem:[#allocation0]]
  $region65: #{tpu_custom_call.1} parent=0
    _
  %s8 = ssub.s32 1, %s6
  %s9 = scalar_select 0, %s8, %s6
  $region1: #{tpu_custom_call.1} parent=0
    #allocation4 [shape = 'u8[262144]{0}', space=vmem, size = 0x40000, scoped, tag = 'input window, operand 0']
    #allocation5 [shape = 's32[2]{0}', space=sflag, size = 0x8, scoped, tag = 'scoped memory for tpu_custom_call.1']
    #allocation6 [shape = 's32[2]{0}', space=sflag, size = 0x8, scoped, tag = 'scoped memory for tpu_custom_call.1']
    #allocation7 [shape = 'u8[512]{0}', space=vmem, size = 0x400, scoped, tag = 'output window, operand 0, single buffered']
    #allocation8 [shape = 'u8[512]{0}', space=vmem, size = 0x400, scoped, tag = 'output window, operand 1, single buffered']
    #allocation9 [shape = 's32[1]{0}', space=sflag, size = 0x4, scoped, tag = 'scoped memory for tpu_custom_call.1']
    %10 = vsyncpa [#allocation5], 0
    %s11 = scalar_lea.sflag [#allocation5], 1
    %12 = vsyncpa %s11, 0
    %13 = vsyncpa [#allocation6], 0
    %14 = vsyncpa [#allocation9], 0
    loop: start=0, step=1, limit=4
    $region2: #{tpu_custom_call.1} parent=1 // loop_pre_header
      _
    $region3: #{tpu_custom_call.1} parent=1 // loop_header
      %s16 = sphi 0, %s20
      %p17 = scmp.ge.s32.totalorder %s16, 4
      %s26 = sphi 0, %s28
      %s29 = sphi 0, %s26
      %s30 = sphi 0, %s29
      %s46 = sphi 0, %s30
      %s50 = sphi 0, %s50
      %s52 = sphi 0, %s50
      %s53 = sphi 0, %s52
      %s67 = sphi 0, %s53
      %s71 = sphi 0, %s71
      %s73 = sphi 0, %s71
      %s74 = sphi 0, %s73
      %s88 = sphi 0, %s74
      %s92 = sphi 0, %s92
      %s94 = sphi 0, %s92
      %s95 = sphi 0, %s94
      %s109 = sphi 0, %s95
      %s113 = sphi 0, %s113
      %s115 = sphi 0, %s113
      %s116 = sphi 0, %s115
      %s130 = sphi 0, %s116
    $region4: #{tpu_custom_call.1} parent=1 // loop_header_branch
      %19 = sbr.rel (%p17) target = $region8
    $region5: #{tpu_custom_call.1} parent=1 // loop_body
      %s21 = ssub.s32 %s16, 1
      %s22 = ssub.s32 %s16, 2
      %s23 = sadd.s32 %s16, 1
      %s24 = ssub.s32 %s16, %s23
      %p25 = scmp.eq.s32.totalorder %s24, 0
      %s27 = sadd.s32 %s26, 1
      %s28 = scalar_select %p25, %s26, %s27
      %p31 = pneg %p25
      %p32 = scmp.eq.s32.totalorder %s16, 1
      %p33 = por %p31, %p32
      %p34 = scmp.ne.s32.totalorder %s26, %s29
      %p35 = scmp.eq.s32.totalorder %s16, 0
      %p36 = por %p34, %p35
      %p37 = scmp.ne.s32.totalorder %s26, %s29
      %p38 = scmp.eq.s32.totalorder %s21, 1
      %p39 = por %p37, %p38
      %p40 = scmp.ne.s32.totalorder %s29, %s30
      %p41 = scmp.eq.s32.totalorder %s21, 0
      %p42 = por %p40, %p41
      %p43 = scmp.ne.s32.totalorder %s29, %s30
      %p44 = scmp.eq.s32.totalorder %s22, 1
      %p45 = por %p43, %p44
      %p47 = scmp.ne.s32.totalorder %s30, %s46
      %p48 = scmp.eq.s32.totalorder %s22, 0
      %p49 = por %p47, %p48
      %s51 = sadd.s32 %s50, 1
      %p54 = scmp.eq.s32.totalorder %s16, 1
      %p55 = scmp.ne.s32.totalorder %s50, %s52
      %p56 = scmp.eq.s32.totalorder %s16, 0
      %p57 = por %p55, %p56
      %p58 = scmp.ne.s32.totalorder %s50, %s52
      %p59 = scmp.eq.s32.totalorder %s21, 1
      %p60 = por %p58, %p59
      %p61 = scmp.ne.s32.totalorder %s52, %s53
      %p62 = scmp.eq.s32.totalorder %s21, 0
      %p63 = por %p61, %p62
      %p64 = scmp.ne.s32.totalorder %s52, %s53
      %p65 = scmp.eq.s32.totalorder %s22, 1
      %p66 = por %p64, %p65
      %p68 = scmp.ne.s32.totalorder %s53, %s67
      %p69 = scmp.eq.s32.totalorder %s22, 0
      %p70 = por %p68, %p69
      %s72 = sadd.s32 %s71, 1
      %p75 = scmp.eq.s32.totalorder %s16, 1
      %p76 = scmp.ne.s32.totalorder %s71, %s73
      %p77 = scmp.eq.s32.totalorder %s16, 0
      %p78 = por %p76, %p77
      %p79 = scmp.ne.s32.totalorder %s71, %s73
      %p80 = scmp.eq.s32.totalorder %s21, 1
      %p81 = por %p79, %p80
      %p82 = scmp.ne.s32.totalorder %s73, %s74
      %p83 = scmp.eq.s32.totalorder %s21, 0
      %p84 = por %p82, %p83
      %p85 = scmp.ne.s32.totalorder %s73, %s74
      %p86 = scmp.eq.s32.totalorder %s22, 1
      %p87 = por %p85, %p86
      %p89 = scmp.ne.s32.totalorder %s74, %s88
      %p90 = scmp.eq.s32.totalorder %s22, 0
      %p91 = por %p89, %p90
      %s93 = sadd.s32 %s92, 1
      %p96 = scmp.eq.s32.totalorder %s16, 1
      %p97 = scmp.ne.s32.totalorder %s92, %s94
      %p98 = scmp.eq.s32.totalorder %s16, 0
      %p99 = por %p97, %p98
      %p100 = scmp.ne.s32.totalorder %s92, %s94
      %p101 = scmp.eq.s32.totalorder %s21, 1
      %p102 = por %p100, %p101
      %p103 = scmp.ne.s32.totalorder %s94, %s95
      %p104 = scmp.eq.s32.totalorder %s21, 0
      %p105 = por %p103, %p104
      %p106 = scmp.ne.s32.totalorder %s94, %s95
      %p107 = scmp.eq.s32.totalorder %s22, 1
      %p108 = por %p106, %p107
      %p110 = scmp.ne.s32.totalorder %s95, %s109
      %p111 = scmp.eq.s32.totalorder %s22, 0
      %p112 = por %p110, %p111
      %s114 = sadd.s32 %s113, 1
      %p117 = scmp.eq.s32.totalorder %s16, 1
      %p118 = scmp.ne.s32.totalorder %s113, %s115
      %p119 = scmp.eq.s32.totalorder %s16, 0
      %p120 = por %p118, %p119
      %p121 = scmp.ne.s32.totalorder %s113, %s115
      %p122 = scmp.eq.s32.totalorder %s21, 1
      %p123 = por %p121, %p122
      %p124 = scmp.ne.s32.totalorder %s115, %s116
      %p125 = scmp.eq.s32.totalorder %s21, 0
      %p126 = por %p124, %p125
      %p127 = scmp.ne.s32.totalorder %s115, %s116
      %p128 = scmp.eq.s32.totalorder %s22, 1
      %p129 = por %p127, %p128
      %p131 = scmp.ne.s32.totalorder %s116, %s130
      %p132 = scmp.eq.s32.totalorder %s22, 0
      %p133 = por %p131, %p132
      %p134 = scmp.le.s32.totalorder 1, %s16
      %p135 = scmp.lt.s32.totalorder %s16, 3
      %p136 = pnand %p134, %p135
      %p137 = pneg %p136
      // Predicated region
      $region9: #{tpu_custom_call.1} parent=5 // pred_check
        _
      $region10: #{tpu_custom_call.1} parent=5 // pred_check_branch
        %139 = sbr.rel (%p136) target = $region12
      $region11: #{tpu_custom_call.1} parent=5 // pred_region
        %s140 = ssub.s32 %s16, 1
        // Predicated region
        $region13: #{tpu_custom_call.1} parent=11 // pred_check
          %p141 = pneg %p63
        $region14: #{tpu_custom_call.1} parent=11 // pred_check_branch
          %143 = sbr.rel (%p141) target = $region16
        $region15: #{tpu_custom_call.1} parent=11 // pred_region
          _
        $region16: #{tpu_custom_call.1} parent=11 // pred_fallthru
          _
        // Predicated region
        $region17: #{tpu_custom_call.1} parent=11 // pred_check
          %p144 = pneg %p84
        $region18: #{tpu_custom_call.1} parent=11 // pred_check_branch
          %146 = sbr.rel (%p144) target = $region20
        $region19: #{tpu_custom_call.1} parent=11 // pred_region
          _
        $region20: #{tpu_custom_call.1} parent=11 // pred_fallthru
          _
      $region12: #{tpu_custom_call.1} parent=5 // pred_fallthru
        _
      %p147 = scmp.lt.s32.totalorder %s16, 2
      // Predicated region
      $region21: #{tpu_custom_call.1} parent=5 // pred_check
        %p148 = pneg %p147
      $region22: #{tpu_custom_call.1} parent=5 // pred_check_branch
        %150 = sbr.rel (%p148) target = $region24
      $region23: #{tpu_custom_call.1} parent=5 // pred_region
        // Predicated region
        $region25: #{tpu_custom_call.1} parent=23 // pred_check
          %p151 = pneg %p36
        $region26: #{tpu_custom_call.1} parent=23 // pred_check_branch
          %153 = sbr.rel (%p151) target = $region28
        $region27: #{tpu_custom_call.1} parent=23 // pred_region
          %s154 = sand.u32 %s26, 1
          %s155 = scalar_lea.sflag [#allocation5], %s154
          %s156 = sand.u32 %s26, 1
          %s157 = smul.addr %s156, 256
          %s158 = scalar_lea.vmem [#allocation4], %s157
          %s159 = smul.u32 32, %s16
          %s161 = ssub.s32 4096, 4096
          %162 = vsyncadd %s155, %s161
          %s163 = smul.addr %s159, 128
          %s164 = scalar_lea.hbm %s0, %s163
          %s165 = sshll.u32 %s158, 4
          %s166 = int_to_ptr.vmem [resolvable:$true] %s165
          %171 = dma.hbm_to_vmem [thread:$0]  %s164, 4096, %s166, %s155, 128, 128, 8
        $region28: #{tpu_custom_call.1} parent=23 // pred_fallthru
          _
      $region24: #{tpu_custom_call.1} parent=5 // pred_fallthru
        _
      %p172 = scmp.le.s32.totalorder 1, %s16
      %p173 = scmp.lt.s32.totalorder %s16, 3
      %p174 = pnand %p172, %p173
      %p175 = pneg %p174
      // Predicated region
      $region29: #{tpu_custom_call.1} parent=5 // pred_check
        _
      $region30: #{tpu_custom_call.1} parent=5 // pred_check_branch
        %177 = sbr.rel (%p174) target = $region32
      $region31: #{tpu_custom_call.1} parent=5 // pred_region
        %s178 = ssub.s32 %s16, 1
        %s179 = sand.u32 %s29, 1
        %s180 = scalar_lea.sflag [#allocation5], %s179
        %s181 = sand.u32 %s29, 1
        %s182 = smul.addr %s181, 256
        %s183 = scalar_lea.vmem [#allocation4], %s182
        // Predicated region
        $region33: #{tpu_custom_call.1} parent=31 // pred_check
          %p184 = pneg %p42
        $region34: #{tpu_custom_call.1} parent=31 // pred_check_branch
          %186 = sbr.rel (%p184) target = $region36
        $region35: #{tpu_custom_call.1} parent=31 // pred_region
          %187 = dma.done %s180, 4096
        $region36: #{tpu_custom_call.1} parent=31 // pred_fallthru
          _
        %s188 = sand.u32 %s29, 1
        %s189 = scalar_lea.sflag [#allocation5], %s188
        %s190 = sand.u32 %s29, 1
        %s191 = smul.addr %s190, 256
        %s192 = scalar_lea.vmem [#allocation4], %s191
        %p193 = pneg %p42
        %p194 = pneg %p39
        %p195 = pneg %p63
        %p196 = pneg %p60
        %p197 = pneg %p84
        %p198 = pneg %p81
        %p199 = pneg %p105
        %p200 = pneg %p102
        %p201 = pneg %p126
        %p202 = pneg %p123
        %s203 = smul.u32 32, %s21
        %p204 = scmp.eq.s32.totalorder %s21, 0
        // Predicated region
        $region37: #{tpu_custom_call.1} parent=31 // pred_check
          %p205 = pneg %p204
        $region38: #{tpu_custom_call.1} parent=31 // pred_check_branch
          %207 = sbr.rel (%p205) target = $region40
        $region39: #{tpu_custom_call.1} parent=31 // pred_region
          %208 = vst [vmem:[#allocation2] sm:$0x1] 0.0
          %209 = vst [vmem:[#allocation3] sm:$0x1] 0.0
        $region40: #{tpu_custom_call.1} parent=31 // pred_fallthru
          _
        %v210 = vld [vmem:[%s183] sm:$0xff]
        %v211 = vld [vmem:[%s183 + $0x8] sm:$0xff]
        %v212 = vld [vmem:[%s183 + $0x10] sm:$0xff]
        %v213 = vld [vmem:[%s183 + $0x18] sm:$0xff]
        %v214 = vld [vmem:[%s183 + $0x20] sm:$0xff]
        %v215 = vld [vmem:[%s183 + $0x28] sm:$0xff]
        %v216 = vld [vmem:[%s183 + $0x30] sm:$0xff]
        %v217 = vld [vmem:[%s183 + $0x38] sm:$0xff]
        %v218 = vld [vmem:[%s183 + $0x40] sm:$0xff]
        %v219 = vld [vmem:[%s183 + $0x48] sm:$0xff]
        %v220 = vld [vmem:[%s183 + $0x50] sm:$0xff]
        %v221 = vld [vmem:[%s183 + $0x58] sm:$0xff]
        %v222 = vld [vmem:[%s183 + $0x60] sm:$0xff]
        %v223 = vld [vmem:[%s183 + $0x68] sm:$0xff]
        %v224 = vld [vmem:[%s183 + $0x70] sm:$0xff]
        %v225 = vld [vmem:[%s183 + $0x78] sm:$0xff]
        %v226 = vld [vmem:[%s183 + $0x80] sm:$0xff]
        %v227 = vld [vmem:[%s183 + $0x88] sm:$0xff]
        %v228 = vld [vmem:[%s183 + $0x90] sm:$0xff]
        %v229 = vld [vmem:[%s183 + $0x98] sm:$0xff]
        %v230 = vld [vmem:[%s183 + $0xa0] sm:$0xff]
        %v231 = vld [vmem:[%s183 + $0xa8] sm:$0xff]
        %v232 = vld [vmem:[%s183 + $0xb0] sm:$0xff]
        %v233 = vld [vmem:[%s183 + $0xb8] sm:$0xff]
        %v234 = vld [vmem:[%s183 + $0xc0] sm:$0xff]
        %v235 = vld [vmem:[%s183 + $0xc8] sm:$0xff]
        %v236 = vld [vmem:[%s183 + $0xd0] sm:$0xff]
        %v237 = vld [vmem:[%s183 + $0xd8] sm:$0xff]
        %v238 = vld [vmem:[%s183 + $0xe0] sm:$0xff]
        %v239 = vld [vmem:[%s183 + $0xe8] sm:$0xff]
        %v240 = vld [vmem:[%s183 + $0xf0] sm:$0xff]
        %v241 = vld [vmem:[%s183 + $0xf8] sm:$0xff]
        %v242 = vld [vmem:[#allocation2] sm:$0x1]
        %v243 = vadd.f32 %v210, %v211
        %v244 = vadd.f32 %v243, %v212
        %v245 = vadd.f32 %v244, %v213
        %v246 = vadd.f32 %v245, %v214
        %v247 = vadd.f32 %v246, %v215
        %v248 = vadd.f32 %v247, %v216
        %v249 = vadd.f32 %v248, %v217
        %v250 = vadd.f32 %v249, %v218
        %v251 = vadd.f32 %v250, %v219
        %v252 = vadd.f32 %v251, %v220
        %v253 = vadd.f32 %v252, %v221
        %v254 = vadd.f32 %v253, %v222
        %v255 = vadd.f32 %v254, %v223
        %v256 = vadd.f32 %v255, %v224
        %v257 = vadd.f32 %v256, %v225
        %v258 = vadd.f32 %v257, %v226
        %v259 = vadd.f32 %v258, %v227
        %v260 = vadd.f32 %v259, %v228
        %v261 = vadd.f32 %v260, %v229
        %v262 = vadd.f32 %v261, %v230
        %v263 = vadd.f32 %v262, %v231
        %v264 = vadd.f32 %v263, %v232
        %v265 = vadd.f32 %v264, %v233
        %v266 = vadd.f32 %v265, %v234
        %v267 = vadd.f32 %v266, %v235
        %v268 = vadd.f32 %v267, %v236
        %v269 = vadd.f32 %v268, %v237
        %v270 = vadd.f32 %v269, %v238
        %v271 = vadd.f32 %v270, %v239
        %v272 = vadd.f32 %v271, %v240
        %v273 = vadd.f32 %v272, %v241
        %v274 = vrot.slane %v273, 4
        %v275 = vadd.f32 %v273, %v274
        %v276 = vrot.slane %v275, 2
        %v277 = vadd.f32 %v275, %v276
        %v278 = vrot.slane %v277, 1
        %v279 = vadd.f32 %v277, %v278
        %v280 = vadd.f32 %v242, %v279
        %281 = vst [vmem:[#allocation2] sm:$0x1] %v280
        %v282 = vld [vmem:[#allocation3] sm:$0x1]
        %v283 = vmul.f32 %v210, %v210
        %v284 = vmul.f32 %v211, %v211
        %v285 = vmul.f32 %v212, %v212
        %v286 = vmul.f32 %v213, %v213
        %v287 = vmul.f32 %v214, %v214
        %v288 = vmul.f32 %v215, %v215
        %v289 = vmul.f32 %v216, %v216
        %v290 = vmul.f32 %v217, %v217
        %v291 = vmul.f32 %v218, %v218
        %v292 = vmul.f32 %v219, %v219
        %v293 = vmul.f32 %v220, %v220
        %v294 = vmul.f32 %v221, %v221
        %v295 = vmul.f32 %v222, %v222
        %v296 = vmul.f32 %v223, %v223
        %v297 = vmul.f32 %v224, %v224
        %v298 = vmul.f32 %v225, %v225
        %v299 = vmul.f32 %v226, %v226
        %v300 = vmul.f32 %v227, %v227
        %v301 = vmul.f32 %v228, %v228
        %v302 = vmul.f32 %v229, %v229
        %v303 = vmul.f32 %v230, %v230
        %v304 = vmul.f32 %v231, %v231
        %v305 = vmul.f32 %v232, %v232
        %v306 = vmul.f32 %v233, %v233
        %v307 = vmul.f32 %v234, %v234
        %v308 = vmul.f32 %v235, %v235
        %v309 = vmul.f32 %v236, %v236
        %v310 = vmul.f32 %v237, %v237
        %v311 = vmul.f32 %v238, %v238
        %v312 = vmul.f32 %v239, %v239
        %v313 = vmul.f32 %v240, %v240
        %v314 = vmul.f32 %v241, %v241
        %v315 = vadd.f32 %v283, %v284
        %v316 = vadd.f32 %v315, %v285
        %v317 = vadd.f32 %v316, %v286
        %v318 = vadd.f32 %v317, %v287
        %v319 = vadd.f32 %v318, %v288
        %v320 = vadd.f32 %v319, %v289
        %v321 = vadd.f32 %v320, %v290
        %v322 = vadd.f32 %v321, %v291
        %v323 = vadd.f32 %v322, %v292
        %v324 = vadd.f32 %v323, %v293
        %v325 = vadd.f32 %v324, %v294
        %v326 = vadd.f32 %v325, %v295
        %v327 = vadd.f32 %v326, %v296
        %v328 = vadd.f32 %v327, %v297
        %v329 = vadd.f32 %v328, %v298
        %v330 = vadd.f32 %v329, %v299
        %v331 = vadd.f32 %v330, %v300
        %v332 = vadd.f32 %v331, %v301
        %v333 = vadd.f32 %v332, %v302
        %v334 = vadd.f32 %v333, %v303
        %v335 = vadd.f32 %v334, %v304
        %v336 = vadd.f32 %v335, %v305
        %v337 = vadd.f32 %v336, %v306
        %v338 = vadd.f32 %v337, %v307
        %v339 = vadd.f32 %v338, %v308
        %v340 = vadd.f32 %v339, %v309
        %v341 = vadd.f32 %v340, %v310
        %v342 = vadd.f32 %v341, %v311
        %v343 = vadd.f32 %v342, %v312
        %v344 = vadd.f32 %v343, %v313
        %v345 = vadd.f32 %v344, %v314
        %v346 = vrot.slane %v345, 4
        %v347 = vadd.f32 %v345, %v346
        %v348 = vrot.slane %v347, 2
        %v349 = vadd.f32 %v347, %v348
        %v350 = vrot.slane %v349, 1
        %v351 = vadd.f32 %v349, %v350
        %v352 = vadd.f32 %v282, %v351
        %353 = vst [vmem:[#allocation3] sm:$0x1] %v352
        %p354 = scmp.eq.s32.totalorder %s21, 1
        // Predicated region
        $region41: #{tpu_custom_call.1} parent=31 // pred_check
          %p355 = pneg %p354
        $region42: #{tpu_custom_call.1} parent=31 // pred_check_branch
          %357 = sbr.rel (%p355) target = $region44
        $region43: #{tpu_custom_call.1} parent=31 // pred_region
          %v358 = vld [vmem:[#allocation2] sm:$0x1]
          %v359 = vmul.f32 %v358, 0.001953125
          %v360 = vld [vmem:[#allocation3] sm:$0x1]
          %v361 = vmul.f32 %v360, 0.001953125
          %v362 = vmul.f32 %v359, %v359
          %v363 = vsub.f32 %v361, %v362
          %v364 = vld [vmem:[%s1] sm:$0x1]
          %v365 = vadd.f32 %v363, 1e-05
          %v366 = vrsqrt.pop %v365
          %v367 = vmul.f32 %v364, %v366
          %368 = vst [vmem:[#allocation7] sm:$0x1] %v367
          %v369 = vld [vmem:[%s2] sm:$0x1]
          %v370 = vmul.f32 %v359, %v367
          %v371 = vsub.f32 %v369, %v370
          %372 = vst [vmem:[#allocation8] sm:$0x1] %v371
        $region44: #{tpu_custom_call.1} parent=31 // pred_fallthru
          _
        // Predicated region
        $region45: #{tpu_custom_call.1} parent=31 // pred_check
          %p373 = pneg %p102
        $region46: #{tpu_custom_call.1} parent=31 // pred_check_branch
          %375 = sbr.rel (%p373) target = $region48
        $region47: #{tpu_custom_call.1} parent=31 // pred_region
          %s377 = ssub.s32 16, 16
          %378 = vsyncadd [#allocation6], %s377
          %s380 = sshll.u32 [#allocation7], 4
          %s381 = int_to_ptr.vmem [resolvable:$true] %s380
          %383 = dma.vmem_to_hbm [thread:$0]  %s381, 16, %s3, [#allocation6]
        $region48: #{tpu_custom_call.1} parent=31 // pred_fallthru
          _
        // Predicated region
        $region49: #{tpu_custom_call.1} parent=31 // pred_check
          %p384 = pneg %p123
        $region50: #{tpu_custom_call.1} parent=31 // pred_check_branch
          %386 = sbr.rel (%p384) target = $region52
        $region51: #{tpu_custom_call.1} parent=31 // pred_region
          %s388 = ssub.s32 16, 16
          %389 = vsyncadd [#allocation9], %s388
          %s391 = sshll.u32 [#allocation8], 4
          %s392 = int_to_ptr.vmem [resolvable:$true] %s391
          %394 = dma.vmem_to_hbm [thread:$0]  %s392, 16, %s4, [#allocation9]
        $region52: #{tpu_custom_call.1} parent=31 // pred_fallthru
          _
        // Predicated region
        $region53: #{tpu_custom_call.1} parent=31 // pred_check
          %p395 = pneg %p102
        $region54: #{tpu_custom_call.1} parent=31 // pred_check_branch
          %397 = sbr.rel (%p395) target = $region56
        $region55: #{tpu_custom_call.1} parent=31 // pred_region
          %398 = dma.done [#allocation6], 16
        $region56: #{tpu_custom_call.1} parent=31 // pred_fallthru
          _
        // Predicated region
        $region57: #{tpu_custom_call.1} parent=31 // pred_check
          %p399 = pneg %p123
        $region58: #{tpu_custom_call.1} parent=31 // pred_check_branch
          %401 = sbr.rel (%p399) target = $region60
        $region59: #{tpu_custom_call.1} parent=31 // pred_region
          %402 = dma.done [#allocation9], 16
        $region60: #{tpu_custom_call.1} parent=31 // pred_fallthru
          _
      $region32: #{tpu_custom_call.1} parent=5 // pred_fallthru
        _
      %p403 = scmp.le.s32.totalorder 2, %s16
      // Predicated region
      $region61: #{tpu_custom_call.1} parent=5 // pred_check
        %p404 = pneg %p403
      $region62: #{tpu_custom_call.1} parent=5 // pred_check_branch
        %406 = sbr.rel (%p404) target = $region64
      $region63: #{tpu_custom_call.1} parent=5 // pred_region
        %s407 = ssub.s32 %s16, 2
      $region64: #{tpu_custom_call.1} parent=5 // pred_fallthru
        _
    $region6: #{tpu_custom_call.1} parent=1 // loop_footer
      %s20 = sadd.s32 1, %s16
    $region7: #{tpu_custom_call.1} parent=1 // loop_footer_branch
      %15 = sbr.rel target = $region3
    $region8: #{tpu_custom_call.1} parent=1 // loop_exit
      _
    %408 = vsyncpa [#allocation5], 1
    %s409 = scalar_lea.sflag [#allocation5], 1
    %410 = vsyncpa %s409, 1
    %411 = vsyncpa [#allocation6], 1
    %s412 = scalar_lea.sflag [#allocation6], 1
    %413 = vsyncpa %s412, 1
    %414 = vsyncpa [#allocation9], 1

</llo_original>
